<compile_context>
chip_gen: v7x
topology: tpu7x:2x2x1
jax: 0.10.0
libtpu: 0.0.40
codegen_flags: <defaults>
</compile_context>

<pallas_src>
import functools

import jax
import jax.numpy as jnp
from jax.experimental import pallas as pl
from jax.experimental.pallas import tpu as pltpu

_LANES = 128


def _dice_partial_kernel(x_ref, t_ref, dice_ref, acc_ref, *, smooth):
    # x_ref, t_ref: (1, TR, 128) VMEM tiles of one sample.
    # dice_ref:     (1, 8, 128) VMEM output tile (per-sample dice, broadcast).
    # acc_ref:      (2,) f32 SMEM accumulators [intersection, sum(x)+sum(t)].
    k = pl.program_id(1)

    @pl.when(k == 0)
    def _init():
        acc_ref[0] = 0.0
        acc_ref[1] = 0.0

    x = x_ref[...].astype(jnp.float32)
    t = t_ref[...].astype(jnp.float32)
    acc_ref[0] += jnp.sum(x * t)     # partial intersection
    acc_ref[1] += jnp.sum(x + t)     # partial (sum_x + sum_t), one fused reduce

    @pl.when(k == pl.num_programs(1) - 1)
    def _finalize():
        inter = acc_ref[0]
        denom = acc_ref[1]
        dice = (2.0 * inter + smooth) / (denom + smooth)
        dice_ref[...] = jnp.full(dice_ref.shape, dice, dtype=dice_ref.dtype)


def dice_loss(inputs, targets, smooth=1.0, block_rows=2048):
    """Pallas-backed equivalent of DiceLoss.forward(inputs, targets, smooth)."""
    n = targets.shape[0]
    x2d = inputs.reshape(n, -1)
    t2d = targets.reshape(n, -1)
    d = x2d.shape[1]

    # Lane-dense layout: rows of 128 lanes, row-tile TR (multiple of 8).
    r = pl.cdiv(d, _LANES)
    k_steps = max(1, pl.cdiv(r, block_rows))
    tr = pl.cdiv(r, k_steps)
    tr = max(8, ((tr + 7) // 8) * 8)
    r_pad = tr * k_steps
    d_pad = r_pad * _LANES
    if d_pad != d:
        # zero padding is neutral for sum(x*t) and sum(x+t)
        x2d = jnp.pad(x2d, ((0, 0), (0, d_pad - d)))
        t2d = jnp.pad(t2d, ((0, 0), (0, d_pad - d)))
    x3 = x2d.reshape(n, r_pad, _LANES)
    t3 = t2d.reshape(n, r_pad, _LANES)

    in_bytes = x3.dtype.itemsize + t3.dtype.itemsize
    block_bytes = tr * _LANES * in_bytes
    # double-buffered 2 inputs + headroom; explicit so we never trip the
    # per-generation default scoped limit (16 MiB v5e / 32 MiB v6e & v7x).
    vmem_limit = int(min(64 * 1024 * 1024, max(8 * 1024 * 1024, 4 * block_bytes)))

    cost = pl.CostEstimate(
        flops=3 * n * d_pad,
        transcendentals=0,
        bytes_accessed=n * d_pad * in_bytes + n * 8 * _LANES * 4,
    )

    out = pl.pallas_call(
        functools.partial(_dice_partial_kernel, smooth=float(smooth)),
        out_shape=jax.ShapeDtypeStruct((n, 8, _LANES), jnp.float32),
        grid_spec=pltpu.PrefetchScalarGridSpec(
            num_scalar_prefetch=0,
            grid=(n, k_steps),
            in_specs=[
                pl.BlockSpec((1, tr, _LANES), lambda i, k: (i, k, 0)),
                pl.BlockSpec((1, tr, _LANES), lambda i, k: (i, k, 0)),
            ],
            out_specs=pl.BlockSpec((1, 8, _LANES), lambda i, k: (i, 0, 0)),
            scratch_shapes=[pltpu.SMEM((2,), jnp.float32)],
        ),
        compiler_params=pltpu.CompilerParams(
            dimension_semantics=("parallel", "arbitrary"),
            vmem_limit_bytes=vmem_limit,
        ),
        cost_estimate=cost,
    )(x3, t3)

    dice = out[:, 0, 0]                       # per-sample dice
    return 1.0 - jnp.sum(dice) / n


def _reference(inputs, targets, smooth=1.0):
    num = targets.shape[0]
    x = inputs.reshape(num, -1).astype(jnp.float32)
    t = targets.reshape(num, -1).astype(jnp.float32)
    inter = (x * t).sum(1)
    dice = (2.0 * inter + smooth) / (x.sum(1) + t.sum(1) + smooth)
    return 1.0 - dice.sum() / num


if __name__ == "__main__":
    key = jax.random.PRNGKey(0)
    k1, k2 = jax.random.split(key)

    # small shapes consistent with a segmentation-style DiceLoss input (NCHW)
    N, C, H, W = 2, 4, 16, 16
    inputs = jax.nn.sigmoid(jax.random.normal(k1, (N, C, H, W), dtype=jnp.float32))
    targets = (jax.random.uniform(k2, (N, C, H, W)) > 0.5).astype(jnp.float32)

    loss = dice_loss(inputs, targets, smooth=1.0)
    jax.block_until_ready(loss)

    ref = _reference(inputs, targets, smooth=1.0)
    assert jnp.allclose(loss, ref, atol=1e-5, rtol=1e-5), (loss, ref)

    print("KERNEL_OK")
</pallas_src>

<mosaic_0001>
module attributes {stable_mosaic.version = 11 : i64} {
  func.func @_dice_partial_kernel(%arg0: i32, %arg1: i32, %arg2: memref<1x8x128xf32, #tpu.memory_space<vmem>>, %arg3: memref<1x8x128xf32, #tpu.memory_space<vmem>>, %arg4: memref<1x8x128xf32, #tpu.memory_space<vmem>>, %arg5: memref<2xf32, #tpu.memory_space<smem>>) attributes {dimension_semantics = [#tpu.dimension_semantics<parallel>, #tpu.dimension_semantics<arbitrary>], iteration_bounds = array<i64: 2, 1>, scalar_prefetch = 0 : i64, scratch_operands = 1 : i64, tpu.core_type = #tpu.core_type<tc>, window_params = [{transform_indices = @transform_0, window_bounds = array<i64: 1, 8, 128>}, {transform_indices = @transform_1, window_bounds = array<i64: 1, 8, 128>}, {transform_indices = @transform_2, window_bounds = array<i64: 1, 8, 128>}]} {
    %c0_i32 = arith.constant 0 : i32
    %0 = arith.cmpi eq, %arg1, %c0_i32 : i32
    %1 = arith.extui %0 : i1 to i32
    %c0_i32_0 = arith.constant 0 : i32
    %2 = arith.cmpi ne, %1, %c0_i32_0 : i32
    scf.if %2 {
      %cst_12 = arith.constant 0.000000e+00 : f32
      %c0_13 = arith.constant 0 : index
      %24 = memref.load %arg5[%c0_13] : memref<2xf32, #tpu.memory_space<smem>>
      memref.store %cst_12, %arg5[%c0_13] : memref<2xf32, #tpu.memory_space<smem>>
      %cst_14 = arith.constant 0.000000e+00 : f32
      %c1_15 = arith.constant 1 : index
      %25 = memref.load %arg5[%c1_15] : memref<2xf32, #tpu.memory_space<smem>>
      memref.store %cst_14, %arg5[%c1_15] : memref<2xf32, #tpu.memory_space<smem>>
    } else {
    }
    %c0 = arith.constant 0 : index
    %c0_1 = arith.constant 0 : index
    %c0_2 = arith.constant 0 : index
    %3 = vector.load %arg2[%c0, %c0_1, %c0_2] : memref<1x8x128xf32, #tpu.memory_space<vmem>>, vector<1x8x128xf32>
    %c0_3 = arith.constant 0 : index
    %c0_4 = arith.constant 0 : index
    %c0_5 = arith.constant 0 : index
    %4 = vector.load %arg3[%c0_3, %c0_4, %c0_5] : memref<1x8x128xf32, #tpu.memory_space<vmem>>, vector<1x8x128xf32>
    %c0_6 = arith.constant 0 : index
    %5 = memref.load %arg5[%c0_6] : memref<2xf32, #tpu.memory_space<smem>>
    %6 = arith.mulf %3, %4 : vector<1x8x128xf32>
    %7 = vector.shape_cast %6 : vector<1x8x128xf32> to vector<1x1x8x128xf32>
    %cst = arith.constant dense<0.000000e+00> : vector<1xf32>
    %8 = vector.multi_reduction <add>, %7, %cst [1, 2, 3] : vector<1x1x8x128xf32> to vector<1xf32>
    %9 = vector.shape_cast %8 : vector<1xf32> to vector<1x1x1x1xf32>
    %10 = vector.extract %9[0, 0, 0, 0] : f32 from vector<1x1x1x1xf32>
    %11 = arith.addf %5, %10 : f32
    %c0_7 = arith.constant 0 : index
    %12 = memref.load %arg5[%c0_7] : memref<2xf32, #tpu.memory_space<smem>>
    memref.store %11, %arg5[%c0_7] : memref<2xf32, #tpu.memory_space<smem>>
    %c1 = arith.constant 1 : index
    %13 = memref.load %arg5[%c1] : memref<2xf32, #tpu.memory_space<smem>>
    %14 = arith.addf %3, %4 : vector<1x8x128xf32>
    %15 = vector.shape_cast %14 : vector<1x8x128xf32> to vector<1x1x8x128xf32>
    %cst_8 = arith.constant dense<0.000000e+00> : vector<1xf32>
    %16 = vector.multi_reduction <add>, %15, %cst_8 [1, 2, 3] : vector<1x1x8x128xf32> to vector<1xf32>
    %17 = vector.shape_cast %16 : vector<1xf32> to vector<1x1x1x1xf32>
    %18 = vector.extract %17[0, 0, 0, 0] : f32 from vector<1x1x1x1xf32>
    %19 = arith.addf %13, %18 : f32
    %c1_9 = arith.constant 1 : index
    %20 = memref.load %arg5[%c1_9] : memref<2xf32, #tpu.memory_space<smem>>
    memref.store %19, %arg5[%c1_9] : memref<2xf32, #tpu.memory_space<smem>>
    %c0_i32_10 = arith.constant 0 : i32
    %21 = arith.cmpi eq, %arg1, %c0_i32_10 : i32
    %22 = arith.extui %21 : i1 to i32
    %c0_i32_11 = arith.constant 0 : i32
    %23 = arith.cmpi ne, %22, %c0_i32_11 : i32
    scf.if %23 {
      %c0_12 = arith.constant 0 : index
      %24 = memref.load %arg5[%c0_12] : memref<2xf32, #tpu.memory_space<smem>>
      %c1_13 = arith.constant 1 : index
      %25 = memref.load %arg5[%c1_13] : memref<2xf32, #tpu.memory_space<smem>>
      %cst_14 = arith.constant 2.000000e+00 : f32
      %26 = arith.mulf %cst_14, %24 : f32
      %cst_15 = arith.constant 1.000000e+00 : f32
      %27 = arith.addf %26, %cst_15 : f32
      %cst_16 = arith.constant 1.000000e+00 : f32
      %28 = arith.addf %25, %cst_16 : f32
      %29 = arith.divf %27, %28 : f32
      %30 = vector.broadcast %29 : f32 to vector<1x8x128xf32>
      %c0_17 = arith.constant 0 : index
      %c0_18 = arith.constant 0 : index
      %c0_19 = arith.constant 0 : index
      %31 = vector.load %arg4[%c0_17, %c0_18, %c0_19] : memref<1x8x128xf32, #tpu.memory_space<vmem>>, vector<1x8x128xf32>
      tpu.vector_store %arg4[%c0_17, %c0_18, %c0_19], %30 {strides = array<i32>} : memref<1x8x128xf32, #tpu.memory_space<vmem>>, vector<1x8x128xf32>,
    } else {
    }
    return
  }
  func.func @transform_0(%arg0: i32, %arg1: i32) -> (i32, i32, i32) {
    %c0_i32 = arith.constant 0 : i32
    %c0_i32_0 = arith.constant 0 : i32
    return %arg0, %arg1, %c0_i32 : i32, i32, i32
  }
  func.func @transform_1(%arg0: i32, %arg1: i32) -> (i32, i32, i32) {
    %c0_i32 = arith.constant 0 : i32
    %c0_i32_0 = arith.constant 0 : i32
    return %arg0, %arg1, %c0_i32 : i32, i32, i32
  }
  func.func @transform_2(%arg0: i32, %arg1: i32) -> (i32, i32, i32) {
    %c0_i32 = arith.constant 0 : i32
    %c0_i32_0 = arith.constant 0 : i32
    %c0_i32_1 = arith.constant 0 : i32
    return %arg0, %c0_i32, %c0_i32_0 : i32, i32, i32
  }
}

</mosaic_0001>

<llo_original>
// kernel: tpu_custom_call.1
$region0: #{tpu_custom_call.1}
  #allocation0 [shape = 'u32[]', space=smem, size = 0x4, offset = 0x4, fixed_abs, tag = 'smem constant byte address 0x4 - core index']
  #allocation1 [shape = 'u32[144,128]{1,0:T(1,128)}', space=vmem, size = 0x12000, scoped, tag = 'internal scratch']
  #allocation2 [shape = 'f32[2]{0:T(128)}', space=smem, size = 0x200, scoped, tag = 'scratch operand']
  %s0 = inlined_call_operand.hbm [shape: f32[2,8,128], index: 0, kind: input, shape index: {}]
  %s1 = inlined_call_operand.hbm [shape: f32[2,8,128], index: 1, kind: input, shape index: {}]
  %s2 = inlined_call_operand.hbm [shape: f32[2,8,128], index: 2, kind: output, shape index: {}]
  %s3 = sld [smem:[#allocation0]]
  $region57: #{tpu_custom_call.1} parent=0
    _
  %s5 = ssub.s32 1, %s3
  %s6 = scalar_select 0, %s5, %s3
  $region1: #{tpu_custom_call.1} parent=0
    #allocation3 [shape = 'u8[8192]{0}', space=vmem, size = 0x2000, scoped, tag = 'input window, operand 0']
    #allocation4 [shape = 's32[2]{0}', space=sflag, size = 0x8, scoped, tag = 'scoped memory for tpu_custom_call.1']
    #allocation5 [shape = 's32[2]{0}', space=sflag, size = 0x8, scoped, tag = 'scoped memory for tpu_custom_call.1']
    #allocation6 [shape = 'u8[8192]{0}', space=vmem, size = 0x2000, scoped, tag = 'input window, operand 1']
    #allocation7 [shape = 's32[2]{0}', space=sflag, size = 0x8, scoped, tag = 'scoped memory for tpu_custom_call.1']
    #allocation8 [shape = 'u8[8192]{0}', space=vmem, size = 0x2000, scoped, tag = 'output window, operand 0']
    %7 = vsyncpa [#allocation4], 0
    %s8 = scalar_lea.sflag [#allocation4], 1
    %9 = vsyncpa %s8, 0
    %10 = vsyncpa [#allocation7], 0
    %s11 = scalar_lea.sflag [#allocation7], 1
    %12 = vsyncpa %s11, 0
    %13 = vsyncpa [#allocation5], 0
    %s14 = scalar_lea.sflag [#allocation5], 1
    %15 = vsyncpa %s14, 0
    loop: start=0, step=1, limit=4
    $region2: #{tpu_custom_call.1} parent=1 // loop_pre_header
      _
    $region3: #{tpu_custom_call.1} parent=1 // loop_header
      %s17 = sphi 0, %s21
      %p18 = scmp.ge.s32.totalorder %s17, 4
      %s24 = sphi 0, %s36
      %s25 = sphi 0, %s32
      %s26 = sphi 0, %s24
      %s27 = sphi 0, %s25
      %s28 = sphi 0, %s26
      %s29 = sphi 0, %s27
      %s41 = sphi 0, %s43
      %s44 = sphi 0, %s41
      %s45 = sphi 0, %s44
      %s61 = sphi 0, %s45
      %s69 = sphi 0, %s71
      %s72 = sphi 0, %s69
      %s73 = sphi 0, %s72
      %s89 = sphi 0, %s73
      %s95 = sphi 0, %s97
      %s98 = sphi 0, %s95
      %s99 = sphi 0, %s98
      %s115 = sphi 0, %s99
    $region4: #{tpu_custom_call.1} parent=1 // loop_header_branch
      %20 = sbr.rel (%p18) target = $region8
    $region5: #{tpu_custom_call.1} parent=1 // loop_body
      %s22 = ssub.s32 %s17, 1
      %s23 = ssub.s32 %s17, 2
      %s30 = sadd.s32 1, %s25
      %p31 = scmp.ge.s32.totalorder %s30, 1
      %s32 = scalar_select %p31, 0, %s30
      %s33 = sadd.s32 1, %s24
      %s34 = scalar_select %p31, %s33, %s24
      %p35 = scmp.ge.s32.totalorder %s34, 2
      %s36 = scalar_select %p35, 0, %s34
      %s37 = ssub.s32 %s24, %s36
      %s38 = ssub.s32 %s25, %s32
      %s39 = sor.u32 %s37, %s38
      %p40 = scmp.eq.s32.totalorder %s39, 0
      %s42 = sadd.s32 %s41, 1
      %s43 = scalar_select %p40, %s41, %s42
      %p46 = pneg %p40
      %p47 = scmp.eq.s32.totalorder %s17, 1
      %p48 = por %p46, %p47
      %p49 = scmp.ne.s32.totalorder %s41, %s44
      %p50 = scmp.eq.s32.totalorder %s17, 0
      %p51 = por %p49, %p50
      %p52 = scmp.ne.s32.totalorder %s41, %s44
      %p53 = scmp.eq.s32.totalorder %s22, 1
      %p54 = por %p52, %p53
      %p55 = scmp.ne.s32.totalorder %s44, %s45
      %p56 = scmp.eq.s32.totalorder %s22, 0
      %p57 = por %p55, %p56
      %p58 = scmp.ne.s32.totalorder %s44, %s45
      %p59 = scmp.eq.s32.totalorder %s23, 1
      %p60 = por %p58, %p59
      %p62 = scmp.ne.s32.totalorder %s45, %s61
      %p63 = scmp.eq.s32.totalorder %s23, 0
      %p64 = por %p62, %p63
      %s65 = ssub.s32 %s24, %s36
      %s66 = ssub.s32 %s25, %s32
      %s67 = sor.u32 %s65, %s66
      %p68 = scmp.eq.s32.totalorder %s67, 0
      %s70 = sadd.s32 %s69, 1
      %s71 = scalar_select %p68, %s69, %s70
      %p74 = pneg %p68
      %p75 = scmp.eq.s32.totalorder %s17, 1
      %p76 = por %p74, %p75
      %p77 = scmp.ne.s32.totalorder %s69, %s72
      %p78 = scmp.eq.s32.totalorder %s17, 0
      %p79 = por %p77, %p78
      %p80 = scmp.ne.s32.totalorder %s69, %s72
      %p81 = scmp.eq.s32.totalorder %s22, 1
      %p82 = por %p80, %p81
      %p83 = scmp.ne.s32.totalorder %s72, %s73
      %p84 = scmp.eq.s32.totalorder %s22, 0
      %p85 = por %p83, %p84
      %p86 = scmp.ne.s32.totalorder %s72, %s73
      %p87 = scmp.eq.s32.totalorder %s23, 1
      %p88 = por %p86, %p87
      %p90 = scmp.ne.s32.totalorder %s73, %s89
      %p91 = scmp.eq.s32.totalorder %s23, 0
      %p92 = por %p90, %p91
      %s93 = ssub.s32 %s24, %s36
      %p94 = scmp.eq.s32.totalorder %s93, 0
      %s96 = sadd.s32 %s95, 1
      %s97 = scalar_select %p94, %s95, %s96
      %p100 = pneg %p94
      %p101 = scmp.eq.s32.totalorder %s17, 1
      %p102 = por %p100, %p101
      %p103 = scmp.ne.s32.totalorder %s95, %s98
      %p104 = scmp.eq.s32.totalorder %s17, 0
      %p105 = por %p103, %p104
      %p106 = scmp.ne.s32.totalorder %s95, %s98
      %p107 = scmp.eq.s32.totalorder %s22, 1
      %p108 = por %p106, %p107
      %p109 = scmp.ne.s32.totalorder %s98, %s99
      %p110 = scmp.eq.s32.totalorder %s22, 0
      %p111 = por %p109, %p110
      %p112 = scmp.ne.s32.totalorder %s98, %s99
      %p113 = scmp.eq.s32.totalorder %s23, 1
      %p114 = por %p112, %p113
      %p116 = scmp.ne.s32.totalorder %s99, %s115
      %p117 = scmp.eq.s32.totalorder %s23, 0
      %p118 = por %p116, %p117
      %p119 = scmp.le.s32.totalorder 1, %s17
      %p120 = scmp.lt.s32.totalorder %s17, 3
      %p121 = pnand %p119, %p120
      %p122 = pneg %p121
      // Predicated region
      $region9: #{tpu_custom_call.1} parent=5 // pred_check
        _
      $region10: #{tpu_custom_call.1} parent=5 // pred_check_branch
        %124 = sbr.rel (%p121) target = $region12
      $region11: #{tpu_custom_call.1} parent=5 // pred_region
        %s125 = ssub.s32 %s17, 1
      $region12: #{tpu_custom_call.1} parent=5 // pred_fallthru
        _
      %p126 = scmp.lt.s32.totalorder %s17, 2
      // Predicated region
      $region13: #{tpu_custom_call.1} parent=5 // pred_check
        %p127 = pneg %p126
      $region14: #{tpu_custom_call.1} parent=5 // pred_check_branch
        %129 = sbr.rel (%p127) target = $region16
      $region15: #{tpu_custom_call.1} parent=5 // pred_region
        // Predicated region
        $region17: #{tpu_custom_call.1} parent=15 // pred_check
          %p130 = pneg %p51
        $region18: #{tpu_custom_call.1} parent=15 // pred_check_branch
          %132 = sbr.rel (%p130) target = $region20
        $region19: #{tpu_custom_call.1} parent=15 // pred_region
          %s133 = sand.u32 %s41, 1
          %s134 = scalar_lea.sflag [#allocation4], %s133
          %s135 = sand.u32 %s41, 1
          %s136 = smul.addr %s135, 8
          %s137 = scalar_lea.vmem [#allocation3], %s136
          %s139 = ssub.s32 128, 128
          %140 = vsyncadd %s134, %s139
          %s141 = sadd.s32 %s25, %s24
          %s142 = smul.addr %s141, 128
          %s143 = scalar_lea.hbm %s0, %s142
          %s145 = sshll.u32 %s137, 4
          %s146 = int_to_ptr.vmem [resolvable:$true] %s145
          %148 = dma.hbm_to_vmem [thread:$0]  %s143, 128, %s146, %s134
        $region20: #{tpu_custom_call.1} parent=15 // pred_fallthru
          _
        // Predicated region
        $region21: #{tpu_custom_call.1} parent=15 // pred_check
          %p149 = pneg %p79
        $region22: #{tpu_custom_call.1} parent=15 // pred_check_branch
          %151 = sbr.rel (%p149) target = $region24
        $region23: #{tpu_custom_call.1} parent=15 // pred_region
          %s152 = sand.u32 %s69, 1
          %s153 = scalar_lea.sflag [#allocation7], %s152
          %s154 = sand.u32 %s69, 1
          %s155 = smul.addr %s154, 8
          %s156 = scalar_lea.vmem [#allocation6], %s155
          %s158 = ssub.s32 128, 128
          %159 = vsyncadd %s153, %s158
          %s160 = sadd.s32 %s25, %s24
          %s161 = smul.addr %s160, 128
          %s162 = scalar_lea.hbm %s1, %s161
          %s164 = sshll.u32 %s156, 4
          %s165 = int_to_ptr.vmem [resolvable:$true] %s164
          %167 = dma.hbm_to_vmem [thread:$0]  %s162, 128, %s165, %s153
        $region24: #{tpu_custom_call.1} parent=15 // pred_fallthru
          _
      $region16: #{tpu_custom_call.1} parent=5 // pred_fallthru
        _
      %p168 = scmp.le.s32.totalorder 1, %s17
      %p169 = scmp.lt.s32.totalorder %s17, 3
      %p170 = pnand %p168, %p169
      %p171 = pneg %p170
      // Predicated region
      $region25: #{tpu_custom_call.1} parent=5 // pred_check
        _
      $region26: #{tpu_custom_call.1} parent=5 // pred_check_branch
        %173 = sbr.rel (%p170) target = $region28
      $region27: #{tpu_custom_call.1} parent=5 // pred_region
        %s174 = ssub.s32 %s17, 1
        %s175 = sand.u32 %s44, 1
        %s176 = scalar_lea.sflag [#allocation4], %s175
        %s177 = sand.u32 %s44, 1
        %s178 = smul.addr %s177, 8
        %s179 = scalar_lea.vmem [#allocation3], %s178
        // Predicated region
        $region29: #{tpu_custom_call.1} parent=27 // pred_check
          %p180 = pneg %p57
        $region30: #{tpu_custom_call.1} parent=27 // pred_check_branch
          %182 = sbr.rel (%p180) target = $region32
        $region31: #{tpu_custom_call.1} parent=27 // pred_region
          %183 = dma.done %s176, 128
        $region32: #{tpu_custom_call.1} parent=27 // pred_fallthru
          _
        %s184 = sand.u32 %s72, 1
        %s185 = scalar_lea.sflag [#allocation7], %s184
        %s186 = sand.u32 %s72, 1
        %s187 = smul.addr %s186, 8
        %s188 = scalar_lea.vmem [#allocation6], %s187
        // Predicated region
        $region33: #{tpu_custom_call.1} parent=27 // pred_check
          %p189 = pneg %p85
        $region34: #{tpu_custom_call.1} parent=27 // pred_check_branch
          %191 = sbr.rel (%p189) target = $region36
        $region35: #{tpu_custom_call.1} parent=27 // pred_region
          %192 = dma.done %s185, 128
        $region36: #{tpu_custom_call.1} parent=27 // pred_fallthru
          _
        %s193 = sand.u32 %s44, 1
        %s194 = scalar_lea.sflag [#allocation4], %s193
        %s195 = sand.u32 %s44, 1
        %s196 = smul.addr %s195, 8
        %s197 = scalar_lea.vmem [#allocation3], %s196
        %p198 = pneg %p57
        %p199 = pneg %p54
        %s200 = sand.u32 %s72, 1
        %s201 = scalar_lea.sflag [#allocation7], %s200
        %s202 = sand.u32 %s72, 1
        %s203 = smul.addr %s202, 8
        %s204 = scalar_lea.vmem [#allocation6], %s203
        %p205 = pneg %p85
        %p206 = pneg %p82
        %p207 = pneg %p111
        %p208 = pneg %p108
        %s209 = sand.u32 %s98, 1
        %s210 = scalar_lea.sflag [#allocation5], %s209
        %s211 = sand.u32 %s98, 1
        %s212 = smul.addr %s211, 8
        %s213 = scalar_lea.vmem [#allocation8], %s212
        %p214 = scmp.eq.s32.totalorder %s27, 0
        // Predicated region
        $region37: #{tpu_custom_call.1} parent=27 // pred_check
          %p215 = pneg %p214
        $region38: #{tpu_custom_call.1} parent=27 // pred_check_branch
          %217 = sbr.rel (%p215) target = $region40
        $region39: #{tpu_custom_call.1} parent=27 // pred_region
          %s218 = scalar_lea.smem [#allocation2], 0
          %219 = sst [smem:[%s218]] 0.0
          %s220 = scalar_lea.smem [#allocation2], 1
          %221 = sst [smem:[%s220]] 0.0
        $region40: #{tpu_custom_call.1} parent=27 // pred_fallthru
          _
        %v222 = vld [vmem:[%s179] sm:$0xff]
        %v223 = vld [vmem:[%s188] sm:$0xff]
        %s224 = sld [smem:[#allocation2]]
        %v225 = vmul.f32 %v222, %v223
        %226 = vadd.xlane.f32.xlu0 %v225
        %v227 = vpop.xlane.xlu0 %226
        %v228 = vrot.slane %v227, 4
        %v229 = vadd.f32 %v227, %v228
        %v230 = vrot.slane %v229, 2
        %v231 = vadd.f32 %v229, %v230
        %v232 = vrot.slane %v231, 1
        %v233 = vadd.f32 %v231, %v232
        %s234 = vtos %v233
        %s235 = sadd.f32 %s224, %s234
        %s236 = scalar_lea.smem [#allocation2], 0
        %237 = sst [smem:[%s236]] %s235
        %s238 = sld [smem:[#allocation2 + $0x1]]
        %v239 = vadd.f32 %v222, %v223
        %240 = vadd.xlane.f32.xlu0 %v239
        %v241 = vpop.xlane.xlu0 %240
        %v242 = vrot.slane %v241, 4
        %v243 = vadd.f32 %v241, %v242
        %v244 = vrot.slane %v243, 2
        %v245 = vadd.f32 %v243, %v244
        %v246 = vrot.slane %v245, 1
        %v247 = vadd.f32 %v245, %v246
        %s248 = vtos %v247
        %s249 = sadd.f32 %s238, %s248
        %s250 = scalar_lea.smem [#allocation2], 1
        %251 = sst [smem:[%s250]] %s249
        // Predicated region
        $region41: #{tpu_custom_call.1} parent=27 // pred_check
          %p252 = pneg %p214
        $region42: #{tpu_custom_call.1} parent=27 // pred_check_branch
          %254 = sbr.rel (%p252) target = $region44
        $region43: #{tpu_custom_call.1} parent=27 // pred_region
          %s255 = sld [smem:[#allocation2]]
          %s256 = sld [smem:[#allocation2 + $0x1]]
          %s257 = smul.f32 %s255, 2.0
          %s258 = sadd.f32 %s257, 1.0
          %s259 = sadd.f32 %s256, 1.0
          %v260 = vstv %s259
          %v261 = vrcp.pop %v260
          %s262 = vtos %v261
          %s263 = smul.f32 %s258, %s262
          %v264 = vstv %s263
          %265 = vst [vmem:[%s213] sm:$0xff] %v264
        $region44: #{tpu_custom_call.1} parent=27 // pred_fallthru
          _
        %s266 = sand.u32 %s98, 1
        %s267 = scalar_lea.sflag [#allocation5], %s266
        %s268 = sand.u32 %s98, 1
        %s269 = smul.addr %s268, 8
        %s270 = scalar_lea.vmem [#allocation8], %s269
        // Predicated region
        $region45: #{tpu_custom_call.1} parent=27 // pred_check
          %p271 = pneg %p108
        $region46: #{tpu_custom_call.1} parent=27 // pred_check_branch
          %273 = sbr.rel (%p271) target = $region48
        $region47: #{tpu_custom_call.1} parent=27 // pred_region
          %s275 = ssub.s32 128, 128
          %276 = vsyncadd %s267, %s275
          %s277 = smul.addr %s26, 128
          %s278 = scalar_lea.hbm %s2, %s277
          %s280 = sshll.u32 %s270, 4
          %s281 = int_to_ptr.vmem [resolvable:$true] %s280
          %283 = dma.vmem_to_hbm [thread:$0]  %s281, 128, %s278, %s267
        $region48: #{tpu_custom_call.1} parent=27 // pred_fallthru
          _
      $region28: #{tpu_custom_call.1} parent=5 // pred_fallthru
        _
      %p284 = scmp.le.s32.totalorder 2, %s17
      // Predicated region
      $region49: #{tpu_custom_call.1} parent=5 // pred_check
        %p285 = pneg %p284
      $region50: #{tpu_custom_call.1} parent=5 // pred_check_branch
        %287 = sbr.rel (%p285) target = $region52
      $region51: #{tpu_custom_call.1} parent=5 // pred_region
        %s288 = ssub.s32 %s17, 2
        // Predicated region
        $region53: #{tpu_custom_call.1} parent=51 // pred_check
          %p289 = pneg %p114
        $region54: #{tpu_custom_call.1} parent=51 // pred_check_branch
          %291 = sbr.rel (%p289) target = $region56
        $region55: #{tpu_custom_call.1} parent=51 // pred_region
          %s292 = sand.u32 %s99, 1
          %s293 = scalar_lea.sflag [#allocation5], %s292
          %s294 = sand.u32 %s99, 1
          %s295 = smul.addr %s294, 8
          %s296 = scalar_lea.vmem [#allocation8], %s295
          %297 = dma.done %s293, 128
        $region56: #{tpu_custom_call.1} parent=51 // pred_fallthru
          _
      $region52: #{tpu_custom_call.1} parent=5 // pred_fallthru
        _
    $region6: #{tpu_custom_call.1} parent=1 // loop_footer
      %s21 = sadd.s32 1, %s17
    $region7: #{tpu_custom_call.1} parent=1 // loop_footer_branch
      %16 = sbr.rel target = $region3
    $region8: #{tpu_custom_call.1} parent=1 // loop_exit
      _
    %298 = vsyncpa [#allocation4], 1
    %s299 = scalar_lea.sflag [#allocation4], 1
    %300 = vsyncpa %s299, 1
    %301 = vsyncpa [#allocation7], 1
    %s302 = scalar_lea.sflag [#allocation7], 1
    %303 = vsyncpa %s302, 1
    %304 = vsyncpa [#allocation5], 1
    %s305 = scalar_lea.sflag [#allocation5], 1
    %306 = vsyncpa %s305, 1

</llo_original>
